<compile_context>
chip_gen: v5e
topology: v5e:2x2
jax: 0.10.0
libtpu: 0.0.40
codegen_flags: <defaults>
</compile_context>

<pallas_src>
import numpy as np
import jax
import jax.numpy as jnp
from jax.experimental import pallas as pl
from jax.experimental.pallas import tpu as pltpu

EPS = 1e-6
NEGATIVE_SLOPE = 0.2  # nonlinearity='leakyrelu' (VNLeakyReLU default slope)


def vn_deepset_kernel(x_rows_ref, x_all_ref, a_ref, w_fused_ref, b_fused_ref,
                      w_dir_ref, out_ref):
    c = w_dir_ref.shape[1] // 3                         # out channels (static)

    x_rows = x_rows_ref[...]                            # (tn, 3C) f32 (residual path)
    x_rows_bf = x_rows.astype(jnp.bfloat16)
    x_all_bf = x_all_ref[...].astype(jnp.bfloat16)      # (N, 3C)

    # scatter_sum(x[edges_1], edges_2)  ==  A_block @ x   (rows of this node block)
    pooled = jnp.dot(a_ref[...], x_all_bf, preferred_element_type=jnp.float32)

    # identity + pooling fused into one MXU matmul (K = 6*C_in), bias added once.
    k_cat = jnp.concatenate([x_rows_bf, pooled.astype(jnp.bfloat16)], axis=1)
    s = jnp.dot(k_cat, w_fused_ref[...],
                preferred_element_type=jnp.float32) + b_fused_ref[...]   # (tn, 3C) f32

    # VNLeakyReLU: d = map_to_dir(s)  (channel mixing per spatial component).
    d = jnp.dot(s.astype(jnp.bfloat16), w_dir_ref[...],
                preferred_element_type=jnp.float32)

    # Per-node, per-channel reductions over the 3 spatial components.
    # Lane index = i*C + c  ->  three static lane slices, added on the VPU.
    sd = s * d
    dd = d * d
    dot = sd[:, 0:c] + sd[:, c:2 * c] + sd[:, 2 * c:3 * c]       # (tn, C)
    dnorm = dd[:, 0:c] + dd[:, c:2 * c] + dd[:, 2 * c:3 * c]     # (tn, C)

    # Simplified leaky blend:  x_out = s - (1-slope)*where(dot>=0, 0, dot/dnorm)*d
    r = jnp.where(dot >= 0.0, 0.0,
                  dot * pl.reciprocal(dnorm + EPS, approx=True))
    r3 = jnp.concatenate([r, r, r], axis=1)                      # back to (tn, 3C)

    # dropout(p=0.0, eval) is the identity; add the exact-f32 residual.
    out_ref[...] = (s - (1.0 - NEGATIVE_SLOPE) * r3 * d) + x_rows


def vn_deepset_layer(x, edges, params, *, tile_n=None):
    """x: (N, 3, C_in) f32, edges: (2, E) int32. Returns ((N, 3, C_out), edges)."""
    N, three, c_in = x.shape
    assert three == 3
    c_out = params["w_id"].shape[0]
    assert c_in == c_out, "residual=True requires in_channels == out_channels"

    e1, e2 = edges[0], edges[1]
    # Dense scatter-sum matrix: A[n, m] = #edges with edges_1 = m, edges_2 = n.
    # NOTE: dim_size fixed to N (torch_scatter uses index.max()+1; the PyTorch
    # module only shape-checks when max(edges_2)+1 == N, so this is equivalent).
    # For static edge sets this matrix should be cached/jitted away by the caller.
    a_mat = (jnp.zeros((N, N), jnp.float32).at[e2, e1].add(1.0)
             .astype(jnp.bfloat16))                        # exact: small integer counts

    eye3 = jnp.eye(3, dtype=jnp.float32)
    # Block-diagonal (per spatial component) channel-mixing weights, fused id+pool.
    w_fused = jnp.concatenate(
        [jnp.kron(eye3, params["w_id"].T), jnp.kron(eye3, params["w_pool"].T)],
        axis=0).astype(jnp.bfloat16)                       # (6*C_in, 3*C_out)
    b_fused = jnp.tile(params["b_id"] + params["b_pool"], 3)[None, :]   # (1, 3*C_out) f32
    w_dir = jnp.kron(eye3, params["w_dir"].T).astype(jnp.bfloat16)      # (3*C_out, 3*C_out)

    # Lane-dense slab: contiguous reinterpretation of (N, 3, C) -> (N, 3C).
    x_flat = x.reshape(N, 3 * c_in).astype(jnp.float32)

    # Row-block grid over nodes (keeps A-row-block + resident x + weights small
    # in VMEM at large N; the parallel axis shards blocks across v7x's 2 TCs).
    if tile_n is None or N % tile_n != 0 or (tile_n < N and tile_n % 8 != 0):
        tile_n = N
    grid = (N // tile_n,)

    out_flat = pl.pallas_call(
        vn_deepset_kernel,
        out_shape=jax.ShapeDtypeStruct((N, 3 * c_out), jnp.float32),
        grid_spec=pltpu.PrefetchScalarGridSpec(
            num_scalar_prefetch=0,
            grid=grid,
            in_specs=[
                pl.BlockSpec((tile_n, 3 * c_in), lambda i: (i, 0)),    # x rows (this block)
                pl.BlockSpec((N, 3 * c_in), lambda i: (0, 0)),         # x (aggregation K operand)
                pl.BlockSpec((tile_n, N), lambda i: (i, 0)),           # A rows (this block)
                pl.BlockSpec((6 * c_in, 3 * c_out), lambda i: (0, 0)),  # fused id/pool weights
                pl.BlockSpec((1, 3 * c_out), lambda i: (0, 0)),        # fused bias
                pl.BlockSpec((3 * c_out, 3 * c_out), lambda i: (0, 0)),  # VN dir weights
            ],
            out_specs=pl.BlockSpec((tile_n, 3 * c_out), lambda i: (i, 0)),
        ),
        compiler_params=pltpu.CompilerParams(
            dimension_semantics=("parallel",)),
    )(x_flat, x_flat, a_mat, w_fused, b_fused, w_dir)

    return out_flat.reshape(N, 3, c_out), edges


def reference_forward(x, edges, params):
    """Plain-JAX f32 reference mirroring the PyTorch forward."""
    N = x.shape[0]
    e1, e2 = edges[0], edges[1]
    identity = x @ params["w_id"].T + params["b_id"]
    nodes_1 = x[e1]
    pooled = jnp.zeros((N,) + x.shape[1:], x.dtype).at[e2].add(nodes_1)
    pooling = pooled @ params["w_pool"].T + params["b_pool"]
    s = identity + pooling                       # (N, 3, Cout)
    st = jnp.swapaxes(s, 1, 2)                   # (N, Cout, 3)  == .transpose(1, -1)
    d = jnp.swapaxes(jnp.swapaxes(st, 1, 2) @ params["w_dir"].T, 1, 2)
    dot = jnp.sum(st * d, axis=2, keepdims=True)
    dnorm = jnp.sum(d * d, axis=2, keepdims=True)
    mask = (dot >= 0).astype(x.dtype)
    out = NEGATIVE_SLOPE * st + (1.0 - NEGATIVE_SLOPE) * (
        mask * st + (1.0 - mask) * (st - (dot / (dnorm + EPS)) * d))
    out = jnp.swapaxes(out, 1, 2)                # back to (N, 3, Cout)
    return out + x, edges


def _fully_connected_edges(n):
    src, dst = np.meshgrid(np.arange(n), np.arange(n), indexing="ij")
    keep = src != dst
    return jnp.asarray(np.stack([src[keep], dst[keep]], axis=0), dtype=jnp.int32)


if __name__ == "__main__":
    key = jax.random.PRNGKey(0)
    k_x, k_x2, k_wid, k_bid, k_wp, k_bp, k_wd = jax.random.split(key, 7)

    C = 16  # in_channels == out_channels (required by residual=True)
    # Deterministic synthetic parameters (nn.Linear weight shapes: (out, in)).
    params = {
        "w_id":   0.1 * jax.random.normal(k_wid, (C, C), jnp.float32),
        "b_id":   0.1 * jax.random.normal(k_bid, (C,), jnp.float32),
        "w_pool": 0.1 * jax.random.normal(k_wp, (C, C), jnp.float32),
        "b_pool": 0.1 * jax.random.normal(k_bp, (C,), jnp.float32),
        "w_dir":  0.1 * jax.random.normal(k_wd, (C, C), jnp.float32),  # VNLeakyReLU map_to_dir (bias=False)
    }

    # Tolerance: matmul operands are bf16 on the MXU (f32 accumulation) and the
    # VN divide uses the EUP approx reciprocal, so compare at bf16-level tolerance.
    RTOL = ATOL = 5e-2

    # --- test 1: single-block grid (N = tile_n = 8) -------------------------
    N1 = 8
    x1 = jax.random.normal(k_x, (N1, 3, C), jnp.float32)
    edges1 = _fully_connected_edges(N1)
    out1, _ = vn_deepset_layer(x1, edges1, params)
    out1 = jax.block_until_ready(out1)
    ref1, _ = reference_forward(x1, edges1, params)
    np.testing.assert_allclose(np.asarray(out1), np.asarray(ref1), rtol=RTOL, atol=ATOL)

    # --- test 2: multi-block node grid (N=16, tile_n=8, grid=(2,)) ----------
    N2 = 16
    x2 = jax.random.normal(k_x2, (N2, 3, C), jnp.float32)
    edges2 = _fully_connected_edges(N2)
    out2, _ = vn_deepset_layer(x2, edges2, params, tile_n=8)
    out2 = jax.block_until_ready(out2)
    ref2, _ = reference_forward(x2, edges2, params)
    np.testing.assert_allclose(np.asarray(out2), np.asarray(ref2), rtol=RTOL, atol=ATOL)

    # TODO(synk): dropout with p > 0 (training mode) not implemented; p=0.0 eval is the identity.
    print("KERNEL_OK")
</pallas_src>

<mosaic_0001>
module attributes {stable_mosaic.version = 11 : i64} {
  func.func @vn_deepset_kernel(%arg0: i32, %arg1: memref<8x48xf32, #tpu.memory_space<vmem>>, %arg2: memref<8x48xf32, #tpu.memory_space<vmem>>, %arg3: memref<8x8xbf16, #tpu.memory_space<vmem>>, %arg4: memref<96x48xbf16, #tpu.memory_space<vmem>>, %arg5: memref<1x48xf32, #tpu.memory_space<vmem>>, %arg6: memref<48x48xbf16, #tpu.memory_space<vmem>>, %arg7: memref<8x48xf32, #tpu.memory_space<vmem>>) attributes {dimension_semantics = [#tpu.dimension_semantics<parallel>], iteration_bounds = array<i64: 1>, scalar_prefetch = 0 : i64, scratch_operands = 0 : i64, tpu.core_type = #tpu.core_type<tc>, window_params = [{transform_indices = @transform_0, window_bounds = array<i64: 8, 48>}, {pipeline_mode = #tpu.pipeline_mode<synchronous>, transform_indices = @transform_1, window_bounds = array<i64: 8, 48>}, {transform_indices = @transform_2, window_bounds = array<i64: 8, 8>}, {pipeline_mode = #tpu.pipeline_mode<synchronous>, transform_indices = @transform_3, window_bounds = array<i64: 96, 48>}, {pipeline_mode = #tpu.pipeline_mode<synchronous>, transform_indices = @transform_4, window_bounds = array<i64: 1, 48>}, {pipeline_mode = #tpu.pipeline_mode<synchronous>, transform_indices = @transform_5, window_bounds = array<i64: 48, 48>}, {transform_indices = @transform_6, window_bounds = array<i64: 8, 48>}]} {
    %c0 = arith.constant 0 : index
    %c0_0 = arith.constant 0 : index
    %0 = vector.load %arg1[%c0, %c0_0] : memref<8x48xf32, #tpu.memory_space<vmem>>, vector<8x48xf32>
    %1 = arith.truncf %0 : vector<8x48xf32> to vector<8x48xbf16>
    %c0_1 = arith.constant 0 : index
    %c0_2 = arith.constant 0 : index
    %2 = vector.load %arg2[%c0_1, %c0_2] : memref<8x48xf32, #tpu.memory_space<vmem>>, vector<8x48xf32>
    %3 = arith.truncf %2 : vector<8x48xf32> to vector<8x48xbf16>
    %c0_3 = arith.constant 0 : index
    %c0_4 = arith.constant 0 : index
    %4 = vector.load %arg3[%c0_3, %c0_4] : memref<8x8xbf16, #tpu.memory_space<vmem>>, vector<8x8xbf16>
    %cst = arith.constant dense<0.000000e+00> : vector<8x48xf32>
    %5 = tpu.matmul %4, %3, %cst {dimension_numbers = #tpu.dot_dimension_numbers<[1], [0], [0], [1], [0, 0, 1, 1], [], []>} : vector<8x8xbf16>, vector<8x48xbf16>, vector<8x48xf32> -> vector<8x48xf32>
    %6 = arith.truncf %5 : vector<8x48xf32> to vector<8x48xbf16>
    %7 = tpu.concatenate %1, %6 in 1 : vector<8x48xbf16>, vector<8x48xbf16> -> vector<8x96xbf16>
    %c0_5 = arith.constant 0 : index
    %c0_6 = arith.constant 0 : index
    %8 = vector.load %arg4[%c0_5, %c0_6] : memref<96x48xbf16, #tpu.memory_space<vmem>>, vector<96x48xbf16>
    %cst_7 = arith.constant dense<0.000000e+00> : vector<8x48xf32>
    %9 = tpu.matmul %7, %8, %cst_7 {dimension_numbers = #tpu.dot_dimension_numbers<[1], [0], [0], [1], [0, 0, 1, 1], [], []>} : vector<8x96xbf16>, vector<96x48xbf16>, vector<8x48xf32> -> vector<8x48xf32>
    %c0_8 = arith.constant 0 : index
    %c0_9 = arith.constant 0 : index
    %10 = vector.load %arg5[%c0_8, %c0_9] : memref<1x48xf32, #tpu.memory_space<vmem>>, vector<1x48xf32>
    %11 = vector.broadcast %10 : vector<1x48xf32> to vector<8x48xf32>
    %12 = arith.addf %9, %11 : vector<8x48xf32>
    %13 = arith.truncf %12 : vector<8x48xf32> to vector<8x48xbf16>
    %c0_10 = arith.constant 0 : index
    %c0_11 = arith.constant 0 : index
    %14 = vector.load %arg6[%c0_10, %c0_11] : memref<48x48xbf16, #tpu.memory_space<vmem>>, vector<48x48xbf16>
    %cst_12 = arith.constant dense<0.000000e+00> : vector<8x48xf32>
    %15 = tpu.matmul %13, %14, %cst_12 {dimension_numbers = #tpu.dot_dimension_numbers<[1], [0], [0], [1], [0, 0, 1, 1], [], []>} : vector<8x48xbf16>, vector<48x48xbf16>, vector<8x48xf32> -> vector<8x48xf32>
    %16 = arith.mulf %12, %15 : vector<8x48xf32>
    %17 = arith.mulf %15, %15 : vector<8x48xf32>
    %18 = vector.extract_strided_slice %16 {offsets = [0, 0], sizes = [8, 16], strides = [1, 1]} : vector<8x48xf32> to vector<8x16xf32>
    %19 = vector.extract_strided_slice %16 {offsets = [0, 16], sizes = [8, 16], strides = [1, 1]} : vector<8x48xf32> to vector<8x16xf32>
    %20 = arith.addf %18, %19 : vector<8x16xf32>
    %21 = vector.extract_strided_slice %16 {offsets = [0, 32], sizes = [8, 16], strides = [1, 1]} : vector<8x48xf32> to vector<8x16xf32>
    %22 = arith.addf %20, %21 : vector<8x16xf32>
    %23 = vector.extract_strided_slice %17 {offsets = [0, 0], sizes = [8, 16], strides = [1, 1]} : vector<8x48xf32> to vector<8x16xf32>
    %24 = vector.extract_strided_slice %17 {offsets = [0, 16], sizes = [8, 16], strides = [1, 1]} : vector<8x48xf32> to vector<8x16xf32>
    %25 = arith.addf %23, %24 : vector<8x16xf32>
    %26 = vector.extract_strided_slice %17 {offsets = [0, 32], sizes = [8, 16], strides = [1, 1]} : vector<8x48xf32> to vector<8x16xf32>
    %27 = arith.addf %25, %26 : vector<8x16xf32>
    %cst_13 = arith.constant 0.000000e+00 : f32
    %28 = vector.broadcast %cst_13 : f32 to vector<8x16xf32>
    %29 = arith.cmpf oge, %22, %28 : vector<8x16xf32>
    %cst_14 = arith.constant 9.99999997E-7 : f32
    %30 = vector.broadcast %cst_14 : f32 to vector<8x16xf32>
    %31 = arith.addf %27, %30 : vector<8x16xf32>
    %32 = tpu.reciprocal %31 {approx = true} : vector<8x16xf32> -> vector<8x16xf32>
    %33 = arith.mulf %22, %32 : vector<8x16xf32>
    %cst_15 = arith.constant 0.000000e+00 : f32
    %34 = vector.broadcast %cst_15 : f32 to vector<8x16xf32>
    %35 = arith.select %29, %34, %33 : vector<8x16xi1>, vector<8x16xf32>
    %36 = tpu.concatenate %35, %35, %35 in 1 : vector<8x16xf32>, vector<8x16xf32>, vector<8x16xf32> -> vector<8x48xf32>
    %cst_16 = arith.constant 8.000000e-01 : f32
    %37 = vector.broadcast %cst_16 : f32 to vector<8x48xf32>
    %38 = arith.mulf %37, %36 : vector<8x48xf32>
    %39 = arith.mulf %38, %15 : vector<8x48xf32>
    %40 = arith.subf %12, %39 : vector<8x48xf32>
    %41 = arith.addf %40, %0 : vector<8x48xf32>
    %c0_17 = arith.constant 0 : index
    %c0_18 = arith.constant 0 : index
    %42 = vector.load %arg7[%c0_17, %c0_18] : memref<8x48xf32, #tpu.memory_space<vmem>>, vector<8x48xf32>
    tpu.vector_store %arg7[%c0_17, %c0_18], %41 {strides = array<i32>} : memref<8x48xf32, #tpu.memory_space<vmem>>, vector<8x48xf32>,
    return
  }
  func.func @transform_0(%arg0: i32) -> (i32, i32) {
    %c0_i32 = arith.constant 0 : i32
    %c0_i32_0 = arith.constant 0 : i32
    return %arg0, %c0_i32 : i32, i32
  }
  func.func @transform_1(%arg0: i32) -> (i32, i32) {
    %c0_i32 = arith.constant 0 : i32
    %c0_i32_0 = arith.constant 0 : i32
    %c0_i32_1 = arith.constant 0 : i32
    return %c0_i32, %c0_i32_0 : i32, i32
  }
  func.func @transform_2(%arg0: i32) -> (i32, i32) {
    %c0_i32 = arith.constant 0 : i32
    %c0_i32_0 = arith.constant 0 : i32
    return %arg0, %c0_i32 : i32, i32
  }
  func.func @transform_3(%arg0: i32) -> (i32, i32) {
    %c0_i32 = arith.constant 0 : i32
    %c0_i32_0 = arith.constant 0 : i32
    %c0_i32_1 = arith.constant 0 : i32
    return %c0_i32, %c0_i32_0 : i32, i32
  }
  func.func @transform_4(%arg0: i32) -> (i32, i32) {
    %c0_i32 = arith.constant 0 : i32
    %c0_i32_0 = arith.constant 0 : i32
    %c0_i32_1 = arith.constant 0 : i32
    return %c0_i32, %c0_i32_0 : i32, i32
  }
  func.func @transform_5(%arg0: i32) -> (i32, i32) {
    %c0_i32 = arith.constant 0 : i32
    %c0_i32_0 = arith.constant 0 : i32
    %c0_i32_1 = arith.constant 0 : i32
    return %c0_i32, %c0_i32_0 : i32, i32
  }
  func.func @transform_6(%arg0: i32) -> (i32, i32) {
    %c0_i32 = arith.constant 0 : i32
    %c0_i32_0 = arith.constant 0 : i32
    return %arg0, %c0_i32 : i32, i32
  }
}

</mosaic_0001>

<llo_original>
// kernel: tpu_custom_call.1
$region0: #{tpu_custom_call.1}
  #allocation0 [shape = 'u32[]', space=smem, size = 0x4, offset = 0x4, fixed_abs, tag = 'smem constant byte address 0x4 - core index']
  #allocation1 [shape = 'u32[72,128]{1,0:T(1,128)}', space=vmem, size = 0x9000, scoped, tag = 'internal scratch']
  %s0 = inlined_call_operand.vmem [shape: f32[8,48], index: 0, kind: input, shape index: {}]
  %s1 = inlined_call_operand.vmem [shape: f32[8,48], index: 1, kind: input, shape index: {}]
  %s2 = inlined_call_operand.vmem [shape: bf16[8,8], index: 2, kind: input, shape index: {}]
  %s3 = inlined_call_operand.vmem [shape: bf16[96,48], index: 3, kind: input, shape index: {}]
  %s4 = inlined_call_operand.vmem [shape: f32[1,48], index: 4, kind: input, shape index: {}]
  %s5 = inlined_call_operand.vmem [shape: bf16[48,48], index: 5, kind: input, shape index: {}]
  %s6 = inlined_call_operand.hbm [shape: f32[8,48], index: 6, kind: output, shape index: {}]
  %s7 = sld [smem:[#allocation0]]
  $region34: #{tpu_custom_call.1} parent=0
    _
  %s9 = ssub.s32 1, %s7
  %s10 = scalar_select 0, %s9, %s7
  $region1: #{tpu_custom_call.1} parent=0
    #allocation2 [shape = 'u8[4096]{0}', space=vmem, size = 0x1000, scoped, tag = 'output window, operand 0, single buffered']
    #allocation3 [shape = 's32[1]{0}', space=sflag, size = 0x4, scoped, tag = 'scoped memory for tpu_custom_call.1']
    %11 = vsyncpa [#allocation3], 0
    // Predicated region
    $region2: #{tpu_custom_call.1} parent=1 // pred_check
      _
    $region3: #{tpu_custom_call.1} parent=1 // pred_check_branch
      %13 = sbr.rel (0) target = $region5
    $region4: #{tpu_custom_call.1} parent=1 // pred_region
      _
    $region5: #{tpu_custom_call.1} parent=1 // pred_fallthru
      _
    // Predicated region
    $region6: #{tpu_custom_call.1} parent=1 // pred_check
      _
    $region7: #{tpu_custom_call.1} parent=1 // pred_check_branch
      %15 = sbr.rel (0) target = $region9
    $region8: #{tpu_custom_call.1} parent=1 // pred_region
      _
    $region9: #{tpu_custom_call.1} parent=1 // pred_fallthru
      _
    // Predicated region
    $region10: #{tpu_custom_call.1} parent=1 // pred_check
      _
    $region11: #{tpu_custom_call.1} parent=1 // pred_check_branch
      %17 = sbr.rel (0) target = $region13
    $region12: #{tpu_custom_call.1} parent=1 // pred_region
      _
    $region13: #{tpu_custom_call.1} parent=1 // pred_fallthru
      _
    // Predicated region
    $region14: #{tpu_custom_call.1} parent=1 // pred_check
      _
    $region15: #{tpu_custom_call.1} parent=1 // pred_check_branch
      %19 = sbr.rel (0) target = $region17
    $region16: #{tpu_custom_call.1} parent=1 // pred_region
      _
    $region17: #{tpu_custom_call.1} parent=1 // pred_fallthru
      _
    // Predicated region
    $region18: #{tpu_custom_call.1} parent=1 // pred_check
      _
    $region19: #{tpu_custom_call.1} parent=1 // pred_check_branch
      %21 = sbr.rel (0) target = $region21
    $region20: #{tpu_custom_call.1} parent=1 // pred_region
      _
    $region21: #{tpu_custom_call.1} parent=1 // pred_fallthru
      _
    // Predicated region
    $region22: #{tpu_custom_call.1} parent=1 // pred_check
      _
    $region23: #{tpu_custom_call.1} parent=1 // pred_check_branch
      %23 = sbr.rel (0) target = $region25
    $region24: #{tpu_custom_call.1} parent=1 // pred_region
      _
    $region25: #{tpu_custom_call.1} parent=1 // pred_fallthru
      _
    %v25 = vld [vmem:[%s0] sm:$0xff]
    %v26 = vpack.c.bf16 %v25, %v25
    %v27 = vld [vmem:[%s1] sm:$0xff]
    %v28 = vpack.c.bf16 %v27, %v27
    %v29 = vld [vmem:[%s2] sm:$0xf]
    %vm30 = vcmask 64512
    %v32 = vsel %vm30, %v29, 0
    %vm34 = vcmask 1043456
    %v36 = vsel %vm34, %v28, 0
    %38 = vmatpush.bf16.msra.mxu0 0
    %39 = vmatpush.bf16.msra.mxu0 0
    %40 = vmatpush.bf16.msra.mxu0 0
    %41 = vmatpush.bf16.msra.mxu0 0
    %42 = vmatpush.bf16.msra.mxu0 0
    %43 = vmatpush.bf16.msra.mxu0 0
    %44 = vmatpush.bf16.msra.mxu0 0
    %45 = vmatpush.bf16.msra.mxu0 %v36
    %46 = vmatmul.bf16.gmra.mxu0 %v32
    %v47 = vpop.f32.mrf.mxu0
    %v48 = vadd.f32 0.0, %v47
    %v49 = vpop.f32.mrf.mxu0
    %50 = vdwg.mxu0
    %v51 = vpack.c.bf16 %v48, %v48
    %v53 = vunpack.c.l.b16 %v51
    %v54 = vpack.c.b16 %v53, %v53
    %55 = vrot.lane.b32.xlu0 %v54, 48
    %v56 = vpop.permute.xlu0 %55
    %vm57 = vcmask 392192
    %v60 = vsel %vm57, %v26, %v56
    %v61 = vld [vmem:[%s3] sm:$0xf]
    %v62 = vld [vmem:[%s3 + $0x4] sm:$0xf]
    %v63 = vld [vmem:[%s3 + $0x8] sm:$0xf]
    %v64 = vld [vmem:[%s3 + $0xc] sm:$0xf]
    %v65 = vld [vmem:[%s3 + $0x10] sm:$0xf]
    %v66 = vld [vmem:[%s3 + $0x14] sm:$0xf]
    %v67 = vld [vmem:[%s3 + $0x18] sm:$0xf]
    %v68 = vld [vmem:[%s3 + $0x1c] sm:$0xf]
    %v69 = vld [vmem:[%s3 + $0x20] sm:$0xf]
    %v70 = vld [vmem:[%s3 + $0x24] sm:$0xf]
    %v71 = vld [vmem:[%s3 + $0x28] sm:$0xf]
    %v72 = vld [vmem:[%s3 + $0x2c] sm:$0xf]
    %v73 = vld [vmem:[%s4] sm:$0x1]
    %v75 = vperm.slane %v73, 0
    %v89 = vunpack.c.l.b16 %v61
    %v90 = vunpack.c.l.b16 %v62
    %v91 = vunpack.c.l.b16 %v63
    %v92 = vunpack.c.l.b16 %v64
    %v93 = vunpack.c.l.b16 %v65
    %v94 = vunpack.c.l.b16 %v66
    %v95 = vunpack.c.l.b16 %v67
    %v96 = vunpack.c.l.b16 %v68
    %v97 = vunpack.c.l.b16 %v69
    %v98 = vunpack.c.l.b16 %v70
    %v99 = vunpack.c.l.b16 %v71
    %v100 = vunpack.c.l.b16 %v72
    %v101 = vpack.c.b16 %v90, %v89
    %v102 = vpack.c.b16 %v92, %v91
    %v103 = vpack.c.b16 %v94, %v93
    %v104 = vpack.c.b16 %v96, %v95
    %v105 = vpack.c.b16 %v98, %v97
    %v106 = vpack.c.b16 %v100, %v99
    %vm113 = vcmask 785408
    %v114 = vsel %vm113, %v60, 0
    %116 = vmatpush.bf16.msra.mxu0 0
    %117 = vmatpush.bf16.msra.mxu0 0
    %118 = vmatpush.bf16.msra.mxu0 %v106
    %119 = vmatpush.bf16.msra.mxu0 %v105
    %120 = vmatpush.bf16.msra.mxu0 %v104
    %121 = vmatpush.bf16.msra.mxu0 %v103
    %122 = vmatpush.bf16.msra.mxu0 %v102
    %123 = vmatpush.bf16.msra.mxu0 %v101
    %124 = vmatmul.bf16.gmra.mxu0 %v114
    %v125 = vpop.f32.mrf.mxu0
    %v126 = vadd.f32 %v75, %v125
    %v127 = vpop.f32.mrf.mxu0
    %128 = vdwg.mxu0
    %v129 = vpack.c.bf16 %v126, %v126
    %v130 = vld [vmem:[%s5] sm:$0xf]
    %v131 = vld [vmem:[%s5 + $0x4] sm:$0xf]
    %v132 = vld [vmem:[%s5 + $0x8] sm:$0xf]
    %v133 = vld [vmem:[%s5 + $0xc] sm:$0xf]
    %v134 = vld [vmem:[%s5 + $0x10] sm:$0xf]
    %v135 = vld [vmem:[%s5 + $0x14] sm:$0xf]
    %v142 = vunpack.c.l.b16 %v130
    %v143 = vunpack.c.l.b16 %v131
    %v144 = vunpack.c.l.b16 %v132
    %v145 = vunpack.c.l.b16 %v133
    %v146 = vunpack.c.l.b16 %v134
    %v147 = vunpack.c.l.b16 %v135
    %v148 = vpack.c.b16 %v143, %v142
    %v149 = vpack.c.b16 %v145, %v144
    %v150 = vpack.c.b16 %v147, %v146
    %v155 = vsel %vm57, %v129, 0
    %157 = vmatpush.bf16.msra.mxu0 0
    %158 = vmatpush.bf16.msra.mxu0 0
    %159 = vmatpush.bf16.msra.mxu0 0
    %160 = vmatpush.bf16.msra.mxu0 0
    %161 = vmatpush.bf16.msra.mxu0 0
    %162 = vmatpush.bf16.msra.mxu0 %v150
    %163 = vmatpush.bf16.msra.mxu0 %v149
    %164 = vmatpush.bf16.msra.mxu0 %v148
    %165 = vmatmul.bf16.gmra.mxu0 %v155
    %v166 = vpop.f32.mrf.mxu0
    %v167 = vadd.f32 0.0, %v166
    %v168 = vpop.f32.mrf.mxu0
    %169 = vdwg.mxu0
    %v170 = vmul.f32 %v126, %v167
    %v171 = vmul.f32 %v167, %v167
    %173 = vrot.lane.b32.xlu0 %v170, 112
    %v174 = vpop.permute.xlu0 %173
    %v176 = vadd.f32 %v170, %v174
    %177 = vrot.lane.b32.xlu0 %v170, 96
    %v178 = vpop.permute.xlu0 %177
    %v180 = vadd.f32 %v176, %v178
    %182 = vrot.lane.b32.xlu0 %v171, 112
    %v183 = vpop.permute.xlu0 %182
    %v185 = vadd.f32 %v171, %v183
    %186 = vrot.lane.b32.xlu0 %v171, 96
    %v187 = vpop.permute.xlu0 %186
    %v189 = vadd.f32 %v185, %v187
    %vm190 = vcmp.ge.f32.partialorder %v180, 0.0
    %v191 = vadd.f32 %v189, 1e-06
    %v192 = vrcp.pop %v191
    %v193 = vmul.f32 %v180, %v192
    %v194 = vsel %vm190, 0.0, %v193
    %196 = vrot.lane.b32.xlu0 %v194, 16
    %v197 = vpop.permute.xlu0 %196
    %199 = vrot.lane.b32.xlu0 %v194, 32
    %v200 = vpop.permute.xlu0 %199
    %vm202 = vcmask 130048
    %v203 = vsel %vm202, %v194, %v197
    %vm204 = vcmask 261120
    %v205 = vsel %vm204, %v203, %v200
    %v206 = vmul.f32 %v205, 0.8
    %v207 = vmul.f32 %v206, %v167
    %v208 = vsub.f32 %v126, %v207
    %v209 = vadd.f32 %v208, %v25
    %210 = vst.msk [vmem:[#allocation2] sm:$0xff] %vm57, %v209
    // Predicated region
    $region26: #{tpu_custom_call.1} parent=1 // pred_check
      _
    $region27: #{tpu_custom_call.1} parent=1 // pred_check_branch
      %212 = sbr.rel (0) target = $region29
    $region28: #{tpu_custom_call.1} parent=1 // pred_region
      %214 = vsyncadd [#allocation3], 0
      %s216 = sshll.u32 [#allocation2], 4
      %s217 = int_to_ptr.vmem [resolvable:$true] %s216
      %s218 = sshll.u32 %s6, 4
      %s219 = int_to_ptr.hbm [resolvable:$true] %s218
      %221 = dma.vmem_to_hbm [thread:$0]  %s217, 128, %s219, [#allocation3]
    $region29: #{tpu_custom_call.1} parent=1 // pred_fallthru
      _
    // Predicated region
    $region30: #{tpu_custom_call.1} parent=1 // pred_check
      _
    $region31: #{tpu_custom_call.1} parent=1 // pred_check_branch
      %223 = sbr.rel (0) target = $region33
    $region32: #{tpu_custom_call.1} parent=1 // pred_region
      %225 = dma.done [#allocation3], 128
    $region33: #{tpu_custom_call.1} parent=1 // pred_fallthru
      _
    %226 = vsyncpa [#allocation3], 1

</llo_original>
